<compile_context>
chip_gen: v6e
topology: v6e:2x2x1
jax: 0.10.0
libtpu: 0.0.40
codegen_flags: <defaults>
</compile_context>

<pallas_src>
import functools
import math

import jax
import jax.numpy as jnp
from jax.experimental import pallas as pl
from jax.experimental.pallas import tpu as pltpu

N_COMPONENTS = 4
GAMMA = 0.5
TILE_N = 512  # points per grid step (lane axis); multiple of 128


# Abramowitz & Stegun 4.4.46: arccos(x) = sqrt(1-x) * P(x) on [0, 1], |err| <= 2e-8.
# Coefficients ordered a7 .. a0 for Horner evaluation.
_ACOS_COEFFS = (
    -0.0012624911, 0.0066700901, -0.0170881256, 0.0308918810,
    -0.0501743046, 0.0889789874, -0.2145988016, 1.5707963050,
)


def _acos(x):
    """arccos built from add/mul/sqrt/select only (guaranteed Mosaic lowering)."""
    ax = jnp.abs(x)
    p = _ACOS_COEFFS[0]
    for a in _ACOS_COEFFS[1:]:
        p = p * ax + a
    r = jnp.sqrt(jnp.maximum(1.0 - ax, 0.0)) * p
    return jnp.where(x < 0.0, math.pi - r, r)


def c_convex_kernel(xt_ref, ys_ref, alphas_ref, out_ref, *, gamma, n_components):
    # xt_ref:     (3, TILE_N) VMEM   -- xyz^T block, points on lanes.
    # ys_ref:     (n_components, 3) SMEM -- unit anchor points (scalars).
    # alphas_ref: (n_components,)   SMEM.
    # out_ref:    (1, TILE_N) VMEM   -- lane-dense output row.
    x0 = xt_ref[0:1, :]
    x1 = xt_ref[1:2, :]
    x2 = xt_ref[2:3, :]

    cs = []
    for k in range(n_components):  # static unroll (n_components = 4)
        inner = ys_ref[k, 0] * x0 + ys_ref[k, 1] * x1 + ys_ref[k, 2] * x2
        d = _acos(inner)                       # spherical distance
        cs.append(0.5 * d * d + alphas_ref[k])

    if gamma is None or gamma == 0.0:
        z = cs[0]
        for c in cs[1:]:
            z = jnp.minimum(z, c)
        out_ref[...] = z
    else:
        neg_inv_gamma = -1.0 / gamma
        s = [c * neg_inv_gamma for c in cs]
        m = s[0]
        for r in s[1:]:
            m = jnp.maximum(m, r)              # logsumexp stabilizer
        acc = jnp.exp(s[0] - m)
        for r in s[1:]:
            acc = acc + jnp.exp(r - m)         # exp/log run on the EUP slot
        out_ref[...] = (-gamma) * (m + jnp.log(acc))


def c_convex_forward(xyz, ys, alphas, gamma=GAMma if False else GAMMA, tile_n=TILE_N):
    """Pallas evaluation of c_convex.forward.  xyz: (N, 3) or (3,) unit vectors."""
    if xyz.ndim == 1:
        xyz = xyz[None, :]  # mirrors torch's unsqueeze in sphere_dist_th -> output shape (1,)
    assert xyz.ndim == 2 and xyz.shape[1] == 3
    n = xyz.shape[0]
    n_components = ys.shape[0]

    n_pad = pl.cdiv(n, tile_n) * tile_n
    # zero padding keeps |inner| <= 1 so padded lanes stay finite; they are sliced off below.
    xt = jnp.zeros((3, n_pad), jnp.float32).at[:, :n].set(xyz.astype(jnp.float32).T)

    kernel = functools.partial(c_convex_kernel, gamma=gamma, n_components=n_components)
    out = pl.pallas_call(
        kernel,
        out_shape=jax.ShapeDtypeStruct((1, n_pad), jnp.float32),
        grid=(n_pad // tile_n,),
        in_specs=[
            pl.BlockSpec((3, tile_n), lambda i: (0, i)),        # xyz^T tiles (pipelined)
            pl.BlockSpec(memory_space=pltpu.MemorySpace.SMEM),  # ys, resident across steps
            pl.BlockSpec(memory_space=pltpu.MemorySpace.SMEM),  # alphas, resident
        ],
        out_specs=pl.BlockSpec((1, tile_n), lambda i: (0, i)),  # lane-dense store
        compiler_params=pltpu.CompilerParams(dimension_semantics=("parallel",)),
    )(xt, ys.astype(jnp.float32), alphas.astype(jnp.float32))
    return out[0, :n]


if __name__ == "__main__":
    key = jax.random.PRNGKey(0)
    k_ys, k_alpha, k_x = jax.random.split(key, 3)

    gamma = GAMMA
    # c_convex.__init__: ys = randn(4,3) normalized, alphas = 0.7 * rand(4)
    ys = jax.random.normal(k_ys, (N_COMPONENTS, 3), jnp.float32)
    ys = ys / jnp.linalg.norm(ys, axis=-1, keepdims=True)
    alphas = 0.7 * jax.random.uniform(k_alpha, (N_COMPONENTS,), jnp.float32)

    N = 8
    xyz = jax.random.normal(k_x, (N, 3), jnp.float32)
    xyz = xyz / jnp.linalg.norm(xyz, axis=-1, keepdims=True)

    z = jax.block_until_ready(c_convex_forward(xyz, ys, alphas, gamma=gamma))

    # pure-JAX reference mirroring the torch module
    inner = jnp.sum(xyz[:, None, :] * ys[None, :, :], axis=-1)   # (N, C)
    d = jnp.arccos(inner)
    cs_ref = 0.5 * d * d + alphas[None, :]                        # (N, C)
    s = -cs_ref / gamma
    m = jnp.max(s, axis=-1, keepdims=True)
    ref = -gamma * (m[:, 0] + jnp.log(jnp.sum(jnp.exp(s - m), axis=-1)))

    assert z.shape == (N,)
    assert jnp.allclose(z, ref, atol=5e-5, rtol=5e-5)

    # 1-D input path (torch returns shape (1,))
    z1 = jax.block_until_ready(c_convex_forward(xyz[0], ys, alphas, gamma=gamma))
    assert z1.shape == (1,)
    assert jnp.allclose(z1, ref[0], atol=5e-5, rtol=5e-5)

    # gamma == 0 hard-min branch of the module
    z_min = jax.block_until_ready(c_convex_forward(xyz, ys, alphas, gamma=0.0))
    ref_min = jnp.min(cs_ref, axis=-1)
    assert jnp.allclose(z_min, ref_min, atol=5e-5, rtol=5e-5)

    print("KERNEL_OK")
</pallas_src>

<mosaic_0001>
module attributes {stable_mosaic.version = 11 : i64} {
  func.func @c_convex_kernel(%arg0: i32, %arg1: memref<3x512xf32, #tpu.memory_space<vmem>>, %arg2: memref<4x3xf32, #tpu.memory_space<smem>>, %arg3: memref<4xf32, #tpu.memory_space<smem>>, %arg4: memref<1x512xf32, #tpu.memory_space<vmem>>) attributes {dimension_semantics = [#tpu.dimension_semantics<parallel>], iteration_bounds = array<i64: 1>, scalar_prefetch = 0 : i64, scratch_operands = 0 : i64, tpu.core_type = #tpu.core_type<tc>, window_params = [{transform_indices = @transform_0, window_bounds = array<i64: 3, 512>}, {transform_indices = @transform_1, window_bounds = array<i64: 4, 3>}, {transform_indices = @transform_2, window_bounds = array<i64: 4>}, {transform_indices = @transform_3, window_bounds = array<i64: 1, 512>}]} {
    %c0 = arith.constant 0 : index
    %c0_0 = arith.constant 0 : index
    %0 = vector.load %arg1[%c0, %c0_0] : memref<3x512xf32, #tpu.memory_space<vmem>>, vector<1x512xf32>
    %c1 = arith.constant 1 : index
    %c0_1 = arith.constant 0 : index
    %1 = vector.load %arg1[%c1, %c0_1] : memref<3x512xf32, #tpu.memory_space<vmem>>, vector<1x512xf32>
    %c2 = arith.constant 2 : index
    %c0_2 = arith.constant 0 : index
    %2 = vector.load %arg1[%c2, %c0_2] : memref<3x512xf32, #tpu.memory_space<vmem>>, vector<1x512xf32>
    %c0_3 = arith.constant 0 : index
    %c0_4 = arith.constant 0 : index
    %3 = memref.load %arg2[%c0_3, %c0_4] : memref<4x3xf32, #tpu.memory_space<smem>>
    %4 = vector.broadcast %3 : f32 to vector<1x512xf32>
    %5 = arith.mulf %4, %0 : vector<1x512xf32>
    %c0_5 = arith.constant 0 : index
    %c1_6 = arith.constant 1 : index
    %6 = memref.load %arg2[%c0_5, %c1_6] : memref<4x3xf32, #tpu.memory_space<smem>>
    %7 = vector.broadcast %6 : f32 to vector<1x512xf32>
    %8 = arith.mulf %7, %1 : vector<1x512xf32>
    %9 = arith.addf %5, %8 : vector<1x512xf32>
    %c0_7 = arith.constant 0 : index
    %c2_8 = arith.constant 2 : index
    %10 = memref.load %arg2[%c0_7, %c2_8] : memref<4x3xf32, #tpu.memory_space<smem>>
    %11 = vector.broadcast %10 : f32 to vector<1x512xf32>
    %12 = arith.mulf %11, %2 : vector<1x512xf32>
    %13 = arith.addf %9, %12 : vector<1x512xf32>
    %14 = math.absf %13 : vector<1x512xf32>
    %cst = arith.constant -0.0012624911 : f32
    %15 = vector.broadcast %cst : f32 to vector<1x512xf32>
    %16 = arith.mulf %15, %14 : vector<1x512xf32>
    %cst_9 = arith.constant 6.670090e-03 : f32
    %17 = vector.broadcast %cst_9 : f32 to vector<1x512xf32>
    %18 = arith.addf %16, %17 : vector<1x512xf32>
    %19 = arith.mulf %18, %14 : vector<1x512xf32>
    %cst_10 = arith.constant -0.0170881264 : f32
    %20 = vector.broadcast %cst_10 : f32 to vector<1x512xf32>
    %21 = arith.addf %19, %20 : vector<1x512xf32>
    %22 = arith.mulf %21, %14 : vector<1x512xf32>
    %cst_11 = arith.constant 0.0308918804 : f32
    %23 = vector.broadcast %cst_11 : f32 to vector<1x512xf32>
    %24 = arith.addf %22, %23 : vector<1x512xf32>
    %25 = arith.mulf %24, %14 : vector<1x512xf32>
    %cst_12 = arith.constant -0.0501743034 : f32
    %26 = vector.broadcast %cst_12 : f32 to vector<1x512xf32>
    %27 = arith.addf %25, %26 : vector<1x512xf32>
    %28 = arith.mulf %27, %14 : vector<1x512xf32>
    %cst_13 = arith.constant 0.0889789909 : f32
    %29 = vector.broadcast %cst_13 : f32 to vector<1x512xf32>
    %30 = arith.addf %28, %29 : vector<1x512xf32>
    %31 = arith.mulf %30, %14 : vector<1x512xf32>
    %cst_14 = arith.constant -0.214598805 : f32
    %32 = vector.broadcast %cst_14 : f32 to vector<1x512xf32>
    %33 = arith.addf %31, %32 : vector<1x512xf32>
    %34 = arith.mulf %33, %14 : vector<1x512xf32>
    %cst_15 = arith.constant 1.57079625 : f32
    %35 = vector.broadcast %cst_15 : f32 to vector<1x512xf32>
    %36 = arith.addf %34, %35 : vector<1x512xf32>
    %cst_16 = arith.constant 1.000000e+00 : f32
    %37 = vector.broadcast %cst_16 : f32 to vector<1x512xf32>
    %38 = arith.subf %37, %14 : vector<1x512xf32>
    %cst_17 = arith.constant 0.000000e+00 : f32
    %39 = vector.broadcast %cst_17 : f32 to vector<1x512xf32>
    %40 = arith.maximumf %38, %39 : vector<1x512xf32>
    %41 = math.sqrt %40 : vector<1x512xf32>
    %42 = arith.mulf %41, %36 : vector<1x512xf32>
    %cst_18 = arith.constant 0.000000e+00 : f32
    %43 = vector.broadcast %cst_18 : f32 to vector<1x512xf32>
    %44 = arith.cmpf olt, %13, %43 : vector<1x512xf32>
    %cst_19 = arith.constant 3.14159274 : f32
    %45 = vector.broadcast %cst_19 : f32 to vector<1x512xf32>
    %46 = arith.subf %45, %42 : vector<1x512xf32>
    %47 = arith.select %44, %46, %42 : vector<1x512xi1>, vector<1x512xf32>
    %cst_20 = arith.constant 5.000000e-01 : f32
    %48 = vector.broadcast %cst_20 : f32 to vector<1x512xf32>
    %49 = arith.mulf %48, %47 : vector<1x512xf32>
    %50 = arith.mulf %49, %47 : vector<1x512xf32>
    %c0_21 = arith.constant 0 : index
    %51 = memref.load %arg3[%c0_21] : memref<4xf32, #tpu.memory_space<smem>>
    %52 = vector.broadcast %51 : f32 to vector<1x512xf32>
    %53 = arith.addf %50, %52 : vector<1x512xf32>
    %c1_22 = arith.constant 1 : index
    %c0_23 = arith.constant 0 : index
    %54 = memref.load %arg2[%c1_22, %c0_23] : memref<4x3xf32, #tpu.memory_space<smem>>
    %55 = vector.broadcast %54 : f32 to vector<1x512xf32>
    %56 = arith.mulf %55, %0 : vector<1x512xf32>
    %c1_24 = arith.constant 1 : index
    %c1_25 = arith.constant 1 : index
    %57 = memref.load %arg2[%c1_24, %c1_25] : memref<4x3xf32, #tpu.memory_space<smem>>
    %58 = vector.broadcast %57 : f32 to vector<1x512xf32>
    %59 = arith.mulf %58, %1 : vector<1x512xf32>
    %60 = arith.addf %56, %59 : vector<1x512xf32>
    %c1_26 = arith.constant 1 : index
    %c2_27 = arith.constant 2 : index
    %61 = memref.load %arg2[%c1_26, %c2_27] : memref<4x3xf32, #tpu.memory_space<smem>>
    %62 = vector.broadcast %61 : f32 to vector<1x512xf32>
    %63 = arith.mulf %62, %2 : vector<1x512xf32>
    %64 = arith.addf %60, %63 : vector<1x512xf32>
    %65 = math.absf %64 : vector<1x512xf32>
    %cst_28 = arith.constant -0.0012624911 : f32
    %66 = vector.broadcast %cst_28 : f32 to vector<1x512xf32>
    %67 = arith.mulf %66, %65 : vector<1x512xf32>
    %cst_29 = arith.constant 6.670090e-03 : f32
    %68 = vector.broadcast %cst_29 : f32 to vector<1x512xf32>
    %69 = arith.addf %67, %68 : vector<1x512xf32>
    %70 = arith.mulf %69, %65 : vector<1x512xf32>
    %cst_30 = arith.constant -0.0170881264 : f32
    %71 = vector.broadcast %cst_30 : f32 to vector<1x512xf32>
    %72 = arith.addf %70, %71 : vector<1x512xf32>
    %73 = arith.mulf %72, %65 : vector<1x512xf32>
    %cst_31 = arith.constant 0.0308918804 : f32
    %74 = vector.broadcast %cst_31 : f32 to vector<1x512xf32>
    %75 = arith.addf %73, %74 : vector<1x512xf32>
    %76 = arith.mulf %75, %65 : vector<1x512xf32>
    %cst_32 = arith.constant -0.0501743034 : f32
    %77 = vector.broadcast %cst_32 : f32 to vector<1x512xf32>
    %78 = arith.addf %76, %77 : vector<1x512xf32>
    %79 = arith.mulf %78, %65 : vector<1x512xf32>
    %cst_33 = arith.constant 0.0889789909 : f32
    %80 = vector.broadcast %cst_33 : f32 to vector<1x512xf32>
    %81 = arith.addf %79, %80 : vector<1x512xf32>
    %82 = arith.mulf %81, %65 : vector<1x512xf32>
    %cst_34 = arith.constant -0.214598805 : f32
    %83 = vector.broadcast %cst_34 : f32 to vector<1x512xf32>
    %84 = arith.addf %82, %83 : vector<1x512xf32>
    %85 = arith.mulf %84, %65 : vector<1x512xf32>
    %cst_35 = arith.constant 1.57079625 : f32
    %86 = vector.broadcast %cst_35 : f32 to vector<1x512xf32>
    %87 = arith.addf %85, %86 : vector<1x512xf32>
    %cst_36 = arith.constant 1.000000e+00 : f32
    %88 = vector.broadcast %cst_36 : f32 to vector<1x512xf32>
    %89 = arith.subf %88, %65 : vector<1x512xf32>
    %cst_37 = arith.constant 0.000000e+00 : f32
    %90 = vector.broadcast %cst_37 : f32 to vector<1x512xf32>
    %91 = arith.maximumf %89, %90 : vector<1x512xf32>
    %92 = math.sqrt %91 : vector<1x512xf32>
    %93 = arith.mulf %92, %87 : vector<1x512xf32>
    %cst_38 = arith.constant 0.000000e+00 : f32
    %94 = vector.broadcast %cst_38 : f32 to vector<1x512xf32>
    %95 = arith.cmpf olt, %64, %94 : vector<1x512xf32>
    %cst_39 = arith.constant 3.14159274 : f32
    %96 = vector.broadcast %cst_39 : f32 to vector<1x512xf32>
    %97 = arith.subf %96, %93 : vector<1x512xf32>
    %98 = arith.select %95, %97, %93 : vector<1x512xi1>, vector<1x512xf32>
    %cst_40 = arith.constant 5.000000e-01 : f32
    %99 = vector.broadcast %cst_40 : f32 to vector<1x512xf32>
    %100 = arith.mulf %99, %98 : vector<1x512xf32>
    %101 = arith.mulf %100, %98 : vector<1x512xf32>
    %c1_41 = arith.constant 1 : index
    %102 = memref.load %arg3[%c1_41] : memref<4xf32, #tpu.memory_space<smem>>
    %103 = vector.broadcast %102 : f32 to vector<1x512xf32>
    %104 = arith.addf %101, %103 : vector<1x512xf32>
    %c2_42 = arith.constant 2 : index
    %c0_43 = arith.constant 0 : index
    %105 = memref.load %arg2[%c2_42, %c0_43] : memref<4x3xf32, #tpu.memory_space<smem>>
    %106 = vector.broadcast %105 : f32 to vector<1x512xf32>
    %107 = arith.mulf %106, %0 : vector<1x512xf32>
    %c2_44 = arith.constant 2 : index
    %c1_45 = arith.constant 1 : index
    %108 = memref.load %arg2[%c2_44, %c1_45] : memref<4x3xf32, #tpu.memory_space<smem>>
    %109 = vector.broadcast %108 : f32 to vector<1x512xf32>
    %110 = arith.mulf %109, %1 : vector<1x512xf32>
    %111 = arith.addf %107, %110 : vector<1x512xf32>
    %c2_46 = arith.constant 2 : index
    %c2_47 = arith.constant 2 : index
    %112 = memref.load %arg2[%c2_46, %c2_47] : memref<4x3xf32, #tpu.memory_space<smem>>
    %113 = vector.broadcast %112 : f32 to vector<1x512xf32>
    %114 = arith.mulf %113, %2 : vector<1x512xf32>
    %115 = arith.addf %111, %114 : vector<1x512xf32>
    %116 = math.absf %115 : vector<1x512xf32>
    %cst_48 = arith.constant -0.0012624911 : f32
    %117 = vector.broadcast %cst_48 : f32 to vector<1x512xf32>
    %118 = arith.mulf %117, %116 : vector<1x512xf32>
    %cst_49 = arith.constant 6.670090e-03 : f32
    %119 = vector.broadcast %cst_49 : f32 to vector<1x512xf32>
    %120 = arith.addf %118, %119 : vector<1x512xf32>
    %121 = arith.mulf %120, %116 : vector<1x512xf32>
    %cst_50 = arith.constant -0.0170881264 : f32
    %122 = vector.broadcast %cst_50 : f32 to vector<1x512xf32>
    %123 = arith.addf %121, %122 : vector<1x512xf32>
    %124 = arith.mulf %123, %116 : vector<1x512xf32>
    %cst_51 = arith.constant 0.0308918804 : f32
    %125 = vector.broadcast %cst_51 : f32 to vector<1x512xf32>
    %126 = arith.addf %124, %125 : vector<1x512xf32>
    %127 = arith.mulf %126, %116 : vector<1x512xf32>
    %cst_52 = arith.constant -0.0501743034 : f32
    %128 = vector.broadcast %cst_52 : f32 to vector<1x512xf32>
    %129 = arith.addf %127, %128 : vector<1x512xf32>
    %130 = arith.mulf %129, %116 : vector<1x512xf32>
    %cst_53 = arith.constant 0.0889789909 : f32
    %131 = vector.broadcast %cst_53 : f32 to vector<1x512xf32>
    %132 = arith.addf %130, %131 : vector<1x512xf32>
    %133 = arith.mulf %132, %116 : vector<1x512xf32>
    %cst_54 = arith.constant -0.214598805 : f32
    %134 = vector.broadcast %cst_54 : f32 to vector<1x512xf32>
    %135 = arith.addf %133, %134 : vector<1x512xf32>
    %136 = arith.mulf %135, %116 : vector<1x512xf32>
    %cst_55 = arith.constant 1.57079625 : f32
    %137 = vector.broadcast %cst_55 : f32 to vector<1x512xf32>
    %138 = arith.addf %136, %137 : vector<1x512xf32>
    %cst_56 = arith.constant 1.000000e+00 : f32
    %139 = vector.broadcast %cst_56 : f32 to vector<1x512xf32>
    %140 = arith.subf %139, %116 : vector<1x512xf32>
    %cst_57 = arith.constant 0.000000e+00 : f32
    %141 = vector.broadcast %cst_57 : f32 to vector<1x512xf32>
    %142 = arith.maximumf %140, %141 : vector<1x512xf32>
    %143 = math.sqrt %142 : vector<1x512xf32>
    %144 = arith.mulf %143, %138 : vector<1x512xf32>
    %cst_58 = arith.constant 0.000000e+00 : f32
    %145 = vector.broadcast %cst_58 : f32 to vector<1x512xf32>
    %146 = arith.cmpf olt, %115, %145 : vector<1x512xf32>
    %cst_59 = arith.constant 3.14159274 : f32
    %147 = vector.broadcast %cst_59 : f32 to vector<1x512xf32>
    %148 = arith.subf %147, %144 : vector<1x512xf32>
    %149 = arith.select %146, %148, %144 : vector<1x512xi1>, vector<1x512xf32>
    %cst_60 = arith.constant 5.000000e-01 : f32
    %150 = vector.broadcast %cst_60 : f32 to vector<1x512xf32>
    %151 = arith.mulf %150, %149 : vector<1x512xf32>
    %152 = arith.mulf %151, %149 : vector<1x512xf32>
    %c2_61 = arith.constant 2 : index
    %153 = memref.load %arg3[%c2_61] : memref<4xf32, #tpu.memory_space<smem>>
    %154 = vector.broadcast %153 : f32 to vector<1x512xf32>
    %155 = arith.addf %152, %154 : vector<1x512xf32>
    %c3 = arith.constant 3 : index
    %c0_62 = arith.constant 0 : index
    %156 = memref.load %arg2[%c3, %c0_62] : memref<4x3xf32, #tpu.memory_space<smem>>
    %157 = vector.broadcast %156 : f32 to vector<1x512xf32>
    %158 = arith.mulf %157, %0 : vector<1x512xf32>
    %c3_63 = arith.constant 3 : index
    %c1_64 = arith.constant 1 : index
    %159 = memref.load %arg2[%c3_63, %c1_64] : memref<4x3xf32, #tpu.memory_space<smem>>
    %160 = vector.broadcast %159 : f32 to vector<1x512xf32>
    %161 = arith.mulf %160, %1 : vector<1x512xf32>
    %162 = arith.addf %158, %161 : vector<1x512xf32>
    %c3_65 = arith.constant 3 : index
    %c2_66 = arith.constant 2 : index
    %163 = memref.load %arg2[%c3_65, %c2_66] : memref<4x3xf32, #tpu.memory_space<smem>>
    %164 = vector.broadcast %163 : f32 to vector<1x512xf32>
    %165 = arith.mulf %164, %2 : vector<1x512xf32>
    %166 = arith.addf %162, %165 : vector<1x512xf32>
    %167 = math.absf %166 : vector<1x512xf32>
    %cst_67 = arith.constant -0.0012624911 : f32
    %168 = vector.broadcast %cst_67 : f32 to vector<1x512xf32>
    %169 = arith.mulf %168, %167 : vector<1x512xf32>
    %cst_68 = arith.constant 6.670090e-03 : f32
    %170 = vector.broadcast %cst_68 : f32 to vector<1x512xf32>
    %171 = arith.addf %169, %170 : vector<1x512xf32>
    %172 = arith.mulf %171, %167 : vector<1x512xf32>
    %cst_69 = arith.constant -0.0170881264 : f32
    %173 = vector.broadcast %cst_69 : f32 to vector<1x512xf32>
    %174 = arith.addf %172, %173 : vector<1x512xf32>
    %175 = arith.mulf %174, %167 : vector<1x512xf32>
    %cst_70 = arith.constant 0.0308918804 : f32
    %176 = vector.broadcast %cst_70 : f32 to vector<1x512xf32>
    %177 = arith.addf %175, %176 : vector<1x512xf32>
    %178 = arith.mulf %177, %167 : vector<1x512xf32>
    %cst_71 = arith.constant -0.0501743034 : f32
    %179 = vector.broadcast %cst_71 : f32 to vector<1x512xf32>
    %180 = arith.addf %178, %179 : vector<1x512xf32>
    %181 = arith.mulf %180, %167 : vector<1x512xf32>
    %cst_72 = arith.constant 0.0889789909 : f32
    %182 = vector.broadcast %cst_72 : f32 to vector<1x512xf32>
    %183 = arith.addf %181, %182 : vector<1x512xf32>
    %184 = arith.mulf %183, %167 : vector<1x512xf32>
    %cst_73 = arith.constant -0.214598805 : f32
    %185 = vector.broadcast %cst_73 : f32 to vector<1x512xf32>
    %186 = arith.addf %184, %185 : vector<1x512xf32>
    %187 = arith.mulf %186, %167 : vector<1x512xf32>
    %cst_74 = arith.constant 1.57079625 : f32
    %188 = vector.broadcast %cst_74 : f32 to vector<1x512xf32>
    %189 = arith.addf %187, %188 : vector<1x512xf32>
    %cst_75 = arith.constant 1.000000e+00 : f32
    %190 = vector.broadcast %cst_75 : f32 to vector<1x512xf32>
    %191 = arith.subf %190, %167 : vector<1x512xf32>
    %cst_76 = arith.constant 0.000000e+00 : f32
    %192 = vector.broadcast %cst_76 : f32 to vector<1x512xf32>
    %193 = arith.maximumf %191, %192 : vector<1x512xf32>
    %194 = math.sqrt %193 : vector<1x512xf32>
    %195 = arith.mulf %194, %189 : vector<1x512xf32>
    %cst_77 = arith.constant 0.000000e+00 : f32
    %196 = vector.broadcast %cst_77 : f32 to vector<1x512xf32>
    %197 = arith.cmpf olt, %166, %196 : vector<1x512xf32>
    %cst_78 = arith.constant 3.14159274 : f32
    %198 = vector.broadcast %cst_78 : f32 to vector<1x512xf32>
    %199 = arith.subf %198, %195 : vector<1x512xf32>
    %200 = arith.select %197, %199, %195 : vector<1x512xi1>, vector<1x512xf32>
    %cst_79 = arith.constant 5.000000e-01 : f32
    %201 = vector.broadcast %cst_79 : f32 to vector<1x512xf32>
    %202 = arith.mulf %201, %200 : vector<1x512xf32>
    %203 = arith.mulf %202, %200 : vector<1x512xf32>
    %c3_80 = arith.constant 3 : index
    %204 = memref.load %arg3[%c3_80] : memref<4xf32, #tpu.memory_space<smem>>
    %205 = vector.broadcast %204 : f32 to vector<1x512xf32>
    %206 = arith.addf %203, %205 : vector<1x512xf32>
    %cst_81 = arith.constant -2.000000e+00 : f32
    %207 = vector.broadcast %cst_81 : f32 to vector<1x512xf32>
    %208 = arith.mulf %53, %207 : vector<1x512xf32>
    %cst_82 = arith.constant -2.000000e+00 : f32
    %209 = vector.broadcast %cst_82 : f32 to vector<1x512xf32>
    %210 = arith.mulf %104, %209 : vector<1x512xf32>
    %cst_83 = arith.constant -2.000000e+00 : f32
    %211 = vector.broadcast %cst_83 : f32 to vector<1x512xf32>
    %212 = arith.mulf %155, %211 : vector<1x512xf32>
    %cst_84 = arith.constant -2.000000e+00 : f32
    %213 = vector.broadcast %cst_84 : f32 to vector<1x512xf32>
    %214 = arith.mulf %206, %213 : vector<1x512xf32>
    %215 = arith.maximumf %208, %210 : vector<1x512xf32>
    %216 = arith.maximumf %215, %212 : vector<1x512xf32>
    %217 = arith.maximumf %216, %214 : vector<1x512xf32>
    %218 = arith.subf %208, %217 : vector<1x512xf32>
    %219 = math.exp %218 : vector<1x512xf32>
    %220 = arith.subf %210, %217 : vector<1x512xf32>
    %221 = math.exp %220 : vector<1x512xf32>
    %222 = arith.addf %219, %221 : vector<1x512xf32>
    %223 = arith.subf %212, %217 : vector<1x512xf32>
    %224 = math.exp %223 : vector<1x512xf32>
    %225 = arith.addf %222, %224 : vector<1x512xf32>
    %226 = arith.subf %214, %217 : vector<1x512xf32>
    %227 = math.exp %226 : vector<1x512xf32>
    %228 = arith.addf %225, %227 : vector<1x512xf32>
    %229 = math.log %228 : vector<1x512xf32>
    %230 = arith.addf %217, %229 : vector<1x512xf32>
    %cst_85 = arith.constant -5.000000e-01 : f32
    %231 = vector.broadcast %cst_85 : f32 to vector<1x512xf32>
    %232 = arith.mulf %231, %230 : vector<1x512xf32>
    %c0_86 = arith.constant 0 : index
    %c0_87 = arith.constant 0 : index
    %233 = vector.load %arg4[%c0_86, %c0_87] : memref<1x512xf32, #tpu.memory_space<vmem>>, vector<1x512xf32>
    tpu.vector_store %arg4[%c0_86, %c0_87], %232 {strides = array<i32>} : memref<1x512xf32, #tpu.memory_space<vmem>>, vector<1x512xf32>,
    return
  }
  func.func @transform_0(%arg0: i32) -> (i32, i32) {
    %c0_i32 = arith.constant 0 : i32
    %c0_i32_0 = arith.constant 0 : i32
    return %c0_i32, %arg0 : i32, i32
  }
  func.func @transform_1(%arg0: i32) -> (i32, i32) {
    %c0_i32 = arith.constant 0 : i32
    %c0_i32_0 = arith.constant 0 : i32
    %c0_i32_1 = arith.constant 0 : i32
    return %c0_i32, %c0_i32_0 : i32, i32
  }
  func.func @transform_2(%arg0: i32) -> i32 {
    %c0_i32 = arith.constant 0 : i32
    %c0_i32_0 = arith.constant 0 : i32
    return %c0_i32 : i32
  }
  func.func @transform_3(%arg0: i32) -> (i32, i32) {
    %c0_i32 = arith.constant 0 : i32
    %c0_i32_0 = arith.constant 0 : i32
    return %c0_i32, %arg0 : i32, i32
  }
}

</mosaic_0001>

<llo_original>
// kernel: tpu_custom_call.1
$region0: #{tpu_custom_call.1}
  #allocation0 [shape = 'u32[]', space=smem, size = 0x4, offset = 0x4, fixed_abs, tag = 'smem constant byte address 0x4 - core index']
  #allocation1 [shape = 'u32[144,128]{1,0:T(1,128)}', space=vmem, size = 0x12000, scoped, tag = 'internal scratch']
  %s0 = inlined_call_operand.hbm [shape: f32[3,512], index: 0, kind: input, shape index: {}]
  %s1 = inlined_call_operand.hbm [shape: f32[4,3], index: 1, kind: input, shape index: {}]
  %s2 = inlined_call_operand.vmem [shape: f32[4], index: 2, kind: input, shape index: {}]
  %s3 = inlined_call_operand.hbm [shape: f32[1,512], index: 3, kind: output, shape index: {}]
  %s4 = sld [smem:[#allocation0]]
  $region34: #{tpu_custom_call.1} parent=0
    _
  %s6 = ssub.s32 1, %s4
  %s7 = scalar_select 0, %s6, %s4
  $region1: #{tpu_custom_call.1} parent=0
    #allocation2 [shape = 'u8[8192]{0}', space=vmem, size = 0x2000, scoped, tag = 'input window, operand 0, single buffered']
    #allocation3 [shape = 's32[1]{0}', space=sflag, size = 0x4, scoped, tag = 'scoped memory for tpu_custom_call.1']
    #allocation4 [shape = 's32[1]{0}', space=sflag, size = 0x4, scoped, tag = 'scoped memory for tpu_custom_call.1']
    #allocation5 [shape = 's32[1]{0}', space=sflag, size = 0x4, scoped, tag = 'scoped memory for tpu_custom_call.1']
    #allocation6 [shape = 's32[1]{0}', space=sflag, size = 0x4, scoped, tag = 'scoped memory for tpu_custom_call.1']
    #allocation7 [shape = 'u8[2048]{0}', space=smem, size = 0x800, scoped, tag = 'input window, operand 1, single buffered']
    #allocation8 [shape = 'u8[512]{0}', space=smem, size = 0x200, scoped, tag = 'input window, operand 2, single buffered']
    #allocation9 [shape = 'u8[2048]{0}', space=vmem, size = 0x800, scoped, tag = 'output window, operand 0, single buffered']
    %8 = vsyncpa [#allocation3], 0
    %9 = vsyncpa [#allocation5], 0
    %10 = vsyncpa [#allocation6], 0
    %11 = vsyncpa [#allocation4], 0
    // Predicated region
    $region2: #{tpu_custom_call.1} parent=1 // pred_check
      _
    $region3: #{tpu_custom_call.1} parent=1 // pred_check_branch
      %13 = sbr.rel (0) target = $region5
    $region4: #{tpu_custom_call.1} parent=1 // pred_region
      %s15 = ssub.s32 256, 256
      %16 = vsyncadd [#allocation3], %s15
      %s18 = sshll.u32 [#allocation2], 4
      %s19 = int_to_ptr.vmem [resolvable:$true] %s18
      %21 = dma.hbm_to_vmem [thread:$0]  %s0, 256, %s19, [#allocation3]
    $region5: #{tpu_custom_call.1} parent=1 // pred_fallthru
      _
    // Predicated region
    $region6: #{tpu_custom_call.1} parent=1 // pred_check
      _
    $region7: #{tpu_custom_call.1} parent=1 // pred_check_branch
      %23 = sbr.rel (0) target = $region9
    $region8: #{tpu_custom_call.1} parent=1 // pred_region
      %s25 = ssub.s32 64, 64
      %26 = vsyncadd [#allocation5], %s25
      %29 = dma.hbm_to_smem %s1, 64, [#allocation7], [#allocation5]
    $region9: #{tpu_custom_call.1} parent=1 // pred_fallthru
      _
    // Predicated region
    $region10: #{tpu_custom_call.1} parent=1 // pred_check
      _
    $region11: #{tpu_custom_call.1} parent=1 // pred_check_branch
      %31 = sbr.rel (0) target = $region13
    $region12: #{tpu_custom_call.1} parent=1 // pred_region
      %s33 = ssub.s32 16, 16
      %34 = vsyncadd [#allocation6], %s33
      %s36 = sshll.u32 %s2, 4
      %s37 = int_to_ptr.vmem [resolvable:$true] %s36
      %39 = dma.vmem_to_smem %s37, 16, [#allocation8], [#allocation6]
    $region13: #{tpu_custom_call.1} parent=1 // pred_fallthru
      _
    // Predicated region
    $region14: #{tpu_custom_call.1} parent=1 // pred_check
      _
    $region15: #{tpu_custom_call.1} parent=1 // pred_check_branch
      %41 = sbr.rel (0) target = $region17
    $region16: #{tpu_custom_call.1} parent=1 // pred_region
      %42 = dma.done [#allocation3], 256
    $region17: #{tpu_custom_call.1} parent=1 // pred_fallthru
      _
    // Predicated region
    $region18: #{tpu_custom_call.1} parent=1 // pred_check
      _
    $region19: #{tpu_custom_call.1} parent=1 // pred_check_branch
      %44 = sbr.rel (0) target = $region21
    $region20: #{tpu_custom_call.1} parent=1 // pred_region
      %45 = dma.done [#allocation5], 64
    $region21: #{tpu_custom_call.1} parent=1 // pred_fallthru
      _
    // Predicated region
    $region22: #{tpu_custom_call.1} parent=1 // pred_check
      _
    $region23: #{tpu_custom_call.1} parent=1 // pred_check_branch
      %47 = sbr.rel (0) target = $region25
    $region24: #{tpu_custom_call.1} parent=1 // pred_region
      %48 = dma.done [#allocation6], 16
    $region25: #{tpu_custom_call.1} parent=1 // pred_fallthru
      _
    %49 = sfence
    %v50 = vld [vmem:[#allocation2] ss:$4 sm:$0xf]
    %s51 = scalar_lea.vmem [#allocation2], 1
    %v52 = vld [vmem:[%s51] ss:$4 sm:$0xf]
    %s53 = scalar_lea.vmem [#allocation2], 2
    %v54 = vld [vmem:[%s53] ss:$4 sm:$0xf]
    %s55 = sld [smem:[#allocation7]]
    %v56 = vstv %s55
    %v57 = vmul.f32 %v56, %v50
    %s58 = sld [smem:[#allocation7 + $0x1]]
    %v59 = vstv %s58
    %v60 = vmul.f32 %v59, %v52
    %v61 = vadd.f32 %v57, %v60
    %s62 = sld [smem:[#allocation7 + $0x2]]
    %v63 = vstv %s62
    %v64 = vmul.f32 %v63, %v54
    %v65 = vadd.f32 %v61, %v64
    %v66 = vand.u32 2147483647, %v65
    %v67 = vmul.f32 %v66, -0.0012624911
    %v68 = vadd.f32 %v67, 0.00667009
    %v69 = vmul.f32 %v68, %v66
    %v70 = vadd.f32 %v69, -0.017088126
    %v71 = vmul.f32 %v70, %v66
    %v72 = vadd.f32 %v71, 0.03089188
    %v73 = vmul.f32 %v72, %v66
    %v74 = vadd.f32 %v73, -0.050174303
    %v75 = vmul.f32 %v74, %v66
    %v76 = vadd.f32 %v75, 0.08897899
    %v77 = vmul.f32 %v76, %v66
    %v78 = vadd.f32 %v77, -0.2145988
    %v79 = vmul.f32 %v78, %v66
    %v80 = vadd.f32 %v79, 1.5707963
    %v81 = vsub.f32 1.0, %v66
    %v82 = vmax.f32 %v81, 0.0
    %v83 = vrsqrt.pop %v82
    %v84 = vmul.f32 %v82, %v83
    %vm85 = vcmp.eq.f32.partialorder %v82, inf
    %v86 = vsel %vm85, %v82, %v84
    %vm87 = vcmp.eq.f32.partialorder %v82, 0.0
    %v88 = vand.u32 %v82, 2147483648
    %v89 = vsel %vm87, %v88, %v86
    %v90 = vmul.f32 %v89, %v80
    %vm91 = vcmp.lt.f32.partialorder %v65, 0.0
    %v92 = vsub.f32 3.1415927, %v90
    %v93 = vsel %vm91, %v92, %v90
    %v94 = vmul.f32 %v93, 0.5
    %v95 = vmul.f32 %v94, %v93
    %s96 = sld [smem:[#allocation8]]
    %v97 = vstv %s96
    %v98 = vadd.f32 %v95, %v97
    %s99 = sld [smem:[#allocation7 + $0x80]]
    %v100 = vstv %s99
    %v101 = vmul.f32 %v100, %v50
    %s102 = sld [smem:[#allocation7 + $0x81]]
    %v103 = vstv %s102
    %v104 = vmul.f32 %v103, %v52
    %v105 = vadd.f32 %v101, %v104
    %s106 = sld [smem:[#allocation7 + $0x82]]
    %v107 = vstv %s106
    %v108 = vmul.f32 %v107, %v54
    %v109 = vadd.f32 %v105, %v108
    %v110 = vand.u32 2147483647, %v109
    %v111 = vmul.f32 %v110, -0.0012624911
    %v112 = vadd.f32 %v111, 0.00667009
    %v113 = vmul.f32 %v112, %v110
    %v114 = vadd.f32 %v113, -0.017088126
    %v115 = vmul.f32 %v114, %v110
    %v116 = vadd.f32 %v115, 0.03089188
    %v117 = vmul.f32 %v116, %v110
    %v118 = vadd.f32 %v117, -0.050174303
    %v119 = vmul.f32 %v118, %v110
    %v120 = vadd.f32 %v119, 0.08897899
    %v121 = vmul.f32 %v120, %v110
    %v122 = vadd.f32 %v121, -0.2145988
    %v123 = vmul.f32 %v122, %v110
    %v124 = vadd.f32 %v123, 1.5707963
    %v125 = vsub.f32 1.0, %v110
    %v126 = vmax.f32 %v125, 0.0
    %v127 = vrsqrt.pop %v126
    %v128 = vmul.f32 %v126, %v127
    %vm129 = vcmp.eq.f32.partialorder %v126, inf
    %v130 = vsel %vm129, %v126, %v128
    %vm131 = vcmp.eq.f32.partialorder %v126, 0.0
    %v132 = vand.u32 %v126, 2147483648
    %v133 = vsel %vm131, %v132, %v130
    %v134 = vmul.f32 %v133, %v124
    %vm135 = vcmp.lt.f32.partialorder %v109, 0.0
    %v136 = vsub.f32 3.1415927, %v134
    %v137 = vsel %vm135, %v136, %v134
    %v138 = vmul.f32 %v137, 0.5
    %v139 = vmul.f32 %v138, %v137
    %s140 = sld [smem:[#allocation8 + $0x1]]
    %v141 = vstv %s140
    %v142 = vadd.f32 %v139, %v141
    %s143 = sld [smem:[#allocation7 + $0x100]]
    %v144 = vstv %s143
    %v145 = vmul.f32 %v144, %v50
    %s146 = sld [smem:[#allocation7 + $0x101]]
    %v147 = vstv %s146
    %v148 = vmul.f32 %v147, %v52
    %v149 = vadd.f32 %v145, %v148
    %s150 = sld [smem:[#allocation7 + $0x102]]
    %v151 = vstv %s150
    %v152 = vmul.f32 %v151, %v54
    %v153 = vadd.f32 %v149, %v152
    %v154 = vand.u32 2147483647, %v153
    %v155 = vmul.f32 %v154, -0.0012624911
    %v156 = vadd.f32 %v155, 0.00667009
    %v157 = vmul.f32 %v156, %v154
    %v158 = vadd.f32 %v157, -0.017088126
    %v159 = vmul.f32 %v158, %v154
    %v160 = vadd.f32 %v159, 0.03089188
    %v161 = vmul.f32 %v160, %v154
    %v162 = vadd.f32 %v161, -0.050174303
    %v163 = vmul.f32 %v162, %v154
    %v164 = vadd.f32 %v163, 0.08897899
    %v165 = vmul.f32 %v164, %v154
    %v166 = vadd.f32 %v165, -0.2145988
    %v167 = vmul.f32 %v166, %v154
    %v168 = vadd.f32 %v167, 1.5707963
    %v169 = vsub.f32 1.0, %v154
    %v170 = vmax.f32 %v169, 0.0
    %v171 = vrsqrt.pop %v170
    %v172 = vmul.f32 %v170, %v171
    %vm173 = vcmp.eq.f32.partialorder %v170, inf
    %v174 = vsel %vm173, %v170, %v172
    %vm175 = vcmp.eq.f32.partialorder %v170, 0.0
    %v176 = vand.u32 %v170, 2147483648
    %v177 = vsel %vm175, %v176, %v174
    %v178 = vmul.f32 %v177, %v168
    %vm179 = vcmp.lt.f32.partialorder %v153, 0.0
    %v180 = vsub.f32 3.1415927, %v178
    %v181 = vsel %vm179, %v180, %v178
    %v182 = vmul.f32 %v181, 0.5
    %v183 = vmul.f32 %v182, %v181
    %s184 = sld [smem:[#allocation8 + $0x2]]
    %v185 = vstv %s184
    %v186 = vadd.f32 %v183, %v185
    %s187 = sld [smem:[#allocation7 + $0x180]]
    %v188 = vstv %s187
    %v189 = vmul.f32 %v188, %v50
    %s190 = sld [smem:[#allocation7 + $0x181]]
    %v191 = vstv %s190
    %v192 = vmul.f32 %v191, %v52
    %v193 = vadd.f32 %v189, %v192
    %s194 = sld [smem:[#allocation7 + $0x182]]
    %v195 = vstv %s194
    %v196 = vmul.f32 %v195, %v54
    %v197 = vadd.f32 %v193, %v196
    %v198 = vand.u32 2147483647, %v197
    %v199 = vmul.f32 %v198, -0.0012624911
    %v200 = vadd.f32 %v199, 0.00667009
    %v201 = vmul.f32 %v200, %v198
    %v202 = vadd.f32 %v201, -0.017088126
    %v203 = vmul.f32 %v202, %v198
    %v204 = vadd.f32 %v203, 0.03089188
    %v205 = vmul.f32 %v204, %v198
    %v206 = vadd.f32 %v205, -0.050174303
    %v207 = vmul.f32 %v206, %v198
    %v208 = vadd.f32 %v207, 0.08897899
    %v209 = vmul.f32 %v208, %v198
    %v210 = vadd.f32 %v209, -0.2145988
    %v211 = vmul.f32 %v210, %v198
    %v212 = vadd.f32 %v211, 1.5707963
    %v213 = vsub.f32 1.0, %v198
    %v214 = vmax.f32 %v213, 0.0
    %v215 = vrsqrt.pop %v214
    %v216 = vmul.f32 %v214, %v215
    %vm217 = vcmp.eq.f32.partialorder %v214, inf
    %v218 = vsel %vm217, %v214, %v216
    %vm219 = vcmp.eq.f32.partialorder %v214, 0.0
    %v220 = vand.u32 %v214, 2147483648
    %v221 = vsel %vm219, %v220, %v218
    %v222 = vmul.f32 %v221, %v212
    %vm223 = vcmp.lt.f32.partialorder %v197, 0.0
    %v224 = vsub.f32 3.1415927, %v222
    %v225 = vsel %vm223, %v224, %v222
    %v226 = vmul.f32 %v225, 0.5
    %v227 = vmul.f32 %v226, %v225
    %s228 = sld [smem:[#allocation8 + $0x3]]
    %v229 = vstv %s228
    %v230 = vadd.f32 %v227, %v229
    %v231 = vmul.f32 %v98, -2.0
    %v232 = vmul.f32 %v142, -2.0
    %v233 = vmul.f32 %v186, -2.0
    %v234 = vmul.f32 %v230, -2.0
    %v235 = vmax.f32 %v231, %v232
    %v236 = vmax.f32 %v235, %v233
    %v237 = vmax.f32 %v236, %v234
    %v238 = vsub.f32 %v231, %v237
    %v239 = vmul.f32 %v238, 1.442695
    %v240 = vpow.pop %v239
    %v241 = vsub.f32 %v232, %v237
    %v242 = vmul.f32 %v241, 1.442695
    %v243 = vpow.pop %v242
    %v244 = vadd.f32 %v240, %v243
    %v245 = vsub.f32 %v233, %v237
    %v246 = vmul.f32 %v245, 1.442695
    %v247 = vpow.pop %v246
    %v248 = vadd.f32 %v244, %v247
    %v249 = vsub.f32 %v234, %v237
    %v250 = vmul.f32 %v249, 1.442695
    %v251 = vpow.pop %v250
    %v252 = vadd.f32 %v248, %v251
    %v253 = vlog2.pop %v252
    %v254 = vmul.f32 %v253, 0.6931472
    %v255 = vadd.f32 %v237, %v254
    %v256 = vmul.f32 %v255, -0.5
    %v257 = vlaneseq
    %vm258 = vcmp.ge.s32.totalorder %v257, 0
    %vm259 = vcmp.lt.s32.totalorder %v257, 512
    %vm260 = vmand %vm258, %vm259
    %261 = vst.msk [vmem:[#allocation9] sm:$0xf] %vm260, %v256
    // Predicated region
    $region26: #{tpu_custom_call.1} parent=1 // pred_check
      _
    $region27: #{tpu_custom_call.1} parent=1 // pred_check_branch
      %263 = sbr.rel (0) target = $region29
    $region28: #{tpu_custom_call.1} parent=1 // pred_region
      %s265 = ssub.s32 64, 64
      %266 = vsyncadd [#allocation4], %s265
      %s268 = sshll.u32 [#allocation9], 4
      %s269 = int_to_ptr.vmem [resolvable:$true] %s268
      %271 = dma.vmem_to_hbm [thread:$0]  %s269, 64, %s3, [#allocation4]
    $region29: #{tpu_custom_call.1} parent=1 // pred_fallthru
      _
    // Predicated region
    $region30: #{tpu_custom_call.1} parent=1 // pred_check
      _
    $region31: #{tpu_custom_call.1} parent=1 // pred_check_branch
      %273 = sbr.rel (0) target = $region33
    $region32: #{tpu_custom_call.1} parent=1 // pred_region
      %274 = dma.done [#allocation4], 64
    $region33: #{tpu_custom_call.1} parent=1 // pred_fallthru
      _
    %275 = vsyncpa [#allocation3], 1
    %276 = vsyncpa [#allocation4], 1
    %277 = vsyncpa [#allocation5], 1
    %278 = vsyncpa [#allocation6], 1

</llo_original>
